<compile_context>
chip_gen: v6e
topology: v6e:2x2x1
jax: 0.10.0
libtpu: 0.0.40
codegen_flags: <defaults>
</compile_context>

<pallas_src>
import functools

import jax
import jax.numpy as jnp
from jax.experimental import pallas as pl
from jax.experimental.pallas import tpu as pltpu


def _round_up(n, m):
    return ((n + m - 1) // m) * m


def _vocab_tile():
    # 256-wide output tiles match the 2x256x256 MXU on v6e/v7x; v5e's 4x128x128 MXU
    # prefers 128 granularity (and wastes less zero padding at small vocab sizes).
    try:
        kind = jax.devices()[0].device_kind.lower()
    except Exception:
        kind = ""
    return 128 if "v5" in kind else 256


def tag_decoder_kernel(x_ref, w1_ref, b1_ref, w2_ref, b2_ref, o_ref):
    # Layer 1: Linear (+ folded eval-mode BatchNorm1d) + ReLU.
    # bf16 operands on the MXU, f32 accumulation; bias + ReLU in f32.
    h = jnp.dot(x_ref[...], w1_ref[...], preferred_element_type=jnp.float32)
    h = jnp.maximum(h + b1_ref[...], 0.0)
    # Dropout: identity in eval mode.
    # Layer 2 on this vocab tile: Linear (+ folded BatchNorm1d) + Sigmoid (f32).
    y = jnp.dot(h.astype(jnp.bfloat16), w2_ref[...],
                preferred_element_type=jnp.float32) + b2_ref[...]
    o_ref[...] = jax.nn.sigmoid(y)


def prepare_params(w1, b1, g1, beta1, mean1, var1,
                   w2, b2, g2, beta2, mean2, var2, eps=1e-5):
    """One-time (model-load) preprocessing.

    Folds eval-mode BatchNorm1d into the adjacent Linear layers
    (W' = W.T * gamma/sqrt(var+eps), b' = (b-mean)*scale + beta), zero-pads to
    lane/sublane-dense shapes, and casts the MXU operands to bfloat16.
    """
    H, E = w1.shape
    V = w2.shape[0]
    TN = _vocab_tile()
    Ep, Hp, Vp = _round_up(E, 128), _round_up(H, 128), _round_up(V, TN)

    s1 = g1 / jnp.sqrt(var1 + eps)                       # (H,)
    W1 = w1.T * s1[None, :]                              # (E, H) f32
    B1 = (b1 - mean1) * s1 + beta1                       # (H,)
    s2 = g2 / jnp.sqrt(var2 + eps)                       # (V,)
    W2 = w2.T * s2[None, :]                              # (H, V) f32
    B2 = (b2 - mean2) * s2 + beta2                       # (V,)

    W1p = jnp.zeros((Ep, Hp), jnp.bfloat16).at[:E, :H].set(W1.astype(jnp.bfloat16))
    B1p = jnp.zeros((1, Hp), jnp.float32).at[0, :H].set(B1.astype(jnp.float32))
    W2p = jnp.zeros((Hp, Vp), jnp.bfloat16).at[:H, :V].set(W2.astype(jnp.bfloat16))
    B2p = jnp.zeros((1, Vp), jnp.float32).at[0, :V].set(B2.astype(jnp.float32))

    dims = (E, H, V, Ep, Hp, Vp, TN)                     # static Python ints
    return (W1p, B1p, W2p, B2p, dims)


@functools.partial(jax.jit, static_argnames=("dims",))
def _forward_impl(x, W1p, B1p, W2p, B2p, *, dims):
    E, H, V, Ep, Hp, Vp, TN = dims
    B = x.shape[0]
    TB = min(128, _round_up(B, 8))                       # sublane-dense batch tile
    Bp = _round_up(B, TB)

    # Only per-call prep: pad/cast the activations (cheap; weights are pre-folded).
    xp = jnp.zeros((Bp, Ep), jnp.bfloat16).at[:B, :E].set(x.astype(jnp.bfloat16))

    n_btiles, n_vtiles = Bp // TB, Vp // TN
    # Advisory cost hint for XLA scheduling (matmul1 is recomputed per vocab tile).
    flops = 2 * Bp * Ep * Hp * n_vtiles + 2 * Bp * Hp * Vp
    bytes_accessed = (Bp * Ep * 2 + Ep * Hp * 2 + Hp * Vp * 2
                      + (Hp + Vp) * 4 + Bp * Vp * 4)

    out = pl.pallas_call(
        tag_decoder_kernel,
        out_shape=jax.ShapeDtypeStruct((Bp, Vp), jnp.float32),
        grid=(n_btiles, n_vtiles),
        in_specs=[
            pl.BlockSpec((TB, Ep), lambda i, j: (i, 0)),   # activation tile (per batch tile)
            pl.BlockSpec((Ep, Hp), lambda i, j: (0, 0)),   # folded W1: constant -> VMEM-resident
            pl.BlockSpec((1, Hp), lambda i, j: (0, 0)),    # folded b1: VMEM-resident
            pl.BlockSpec((Hp, TN), lambda i, j: (0, j)),   # folded W2: streamed per vocab tile
            pl.BlockSpec((1, TN), lambda i, j: (0, j)),    # folded b2 tile
        ],
        out_specs=pl.BlockSpec((TB, TN), lambda i, j: (i, j)),   # lane-dense output slab
        compiler_params=pltpu.CompilerParams(
            # Both axes independent -> megacore-shardable; with a single batch tile the
            # vocab axis still keeps v7x's second TensorCore busy.
            dimension_semantics=("parallel", "parallel"),
            # Explicit scoped-VMEM headroom (safe on v5e/v6e/v7x); W2 is streamed in
            # (Hp, TN) tiles so residency stays bounded as the tag vocabulary grows.
            vmem_limit_bytes=32 * 1024 * 1024,
        ),
        cost_estimate=pl.CostEstimate(
            flops=flops, transcendentals=Bp * Vp, bytes_accessed=bytes_accessed),
    )(xp, W1p, B1p, W2p, B2p)

    return out[:B, :V]


def tag_decoder_forward(x, params):
    W1p, B1p, W2p, B2p, dims = params
    return _forward_impl(x, W1p, B1p, W2p, B2p, dims=dims)


def ref_forward(x,
                w1, b1, g1, beta1, mean1, var1,
                w2, b2, g2, beta2, mean2, var2,
                eps=1e-5):
    """Pure-JAX f32 reference mirroring the PyTorch module in eval mode."""
    h = x @ w1.T + b1
    h = (h - mean1) / jnp.sqrt(var1 + eps) * g1 + beta1
    h = jnp.maximum(h, 0.0)
    # Dropout: identity in eval mode.
    y = h @ w2.T + b2
    y = (y - mean2) / jnp.sqrt(var2 + eps) * g2 + beta2
    return jax.nn.sigmoid(y)


if __name__ == "__main__":
    B = 2
    ENCODING, HIDDEN, VOCAB = 50, 200, 300      # module defaults: encoding=50, hidden=200

    key = jax.random.PRNGKey(0)
    (k_x, k_w1, k_b1, k_g1, k_be1, k_m1, k_v1,
     k_w2, k_b2, k_g2, k_be2, k_m2, k_v2) = jax.random.split(key, 13)

    # Deterministic parameter init (shapes follow nn.Linear / nn.BatchNorm1d)
    bnd1 = 1.0 / (ENCODING ** 0.5)
    w1 = jax.random.uniform(k_w1, (HIDDEN, ENCODING), jnp.float32, -bnd1, bnd1)
    b1 = jax.random.uniform(k_b1, (HIDDEN,), jnp.float32, -bnd1, bnd1)
    g1 = jax.random.uniform(k_g1, (HIDDEN,), jnp.float32, 0.8, 1.2)
    beta1 = 0.1 * jax.random.normal(k_be1, (HIDDEN,), jnp.float32)
    mean1 = 0.1 * jax.random.normal(k_m1, (HIDDEN,), jnp.float32)
    var1 = jax.random.uniform(k_v1, (HIDDEN,), jnp.float32, 0.5, 1.5)

    bnd2 = 1.0 / (HIDDEN ** 0.5)
    w2 = jax.random.uniform(k_w2, (VOCAB, HIDDEN), jnp.float32, -bnd2, bnd2)
    b2 = jax.random.uniform(k_b2, (VOCAB,), jnp.float32, -bnd2, bnd2)
    g2 = jax.random.uniform(k_g2, (VOCAB,), jnp.float32, 0.8, 1.2)
    beta2 = 0.1 * jax.random.normal(k_be2, (VOCAB,), jnp.float32)
    mean2 = 0.1 * jax.random.normal(k_m2, (VOCAB,), jnp.float32)
    var2 = jax.random.uniform(k_v2, (VOCAB,), jnp.float32, 0.5, 1.5)

    x = jax.random.normal(k_x, (B, ENCODING), jnp.float32)

    # One-time (model-load) fold/pad/cast -- out of the per-forward hot path.
    params = prepare_params(w1, b1, g1, beta1, mean1, var1,
                            w2, b2, g2, beta2, mean2, var2)
    params = jax.block_until_ready(params)

    out = tag_decoder_forward(x, params)
    out = jax.block_until_ready(out)

    ref = ref_forward(x,
                      w1, b1, g1, beta1, mean1, var1,
                      w2, b2, g2, beta2, mean2, var2)

    assert out.shape == (B, VOCAB)
    assert bool(jnp.all(jnp.isfinite(out)))
    # bf16 MXU operands (f32 accumulation): relaxed tolerance vs. the f32 reference.
    assert jnp.allclose(out, ref, atol=1e-2, rtol=1e-2)

    print("KERNEL_OK")
</pallas_src>

<mosaic_0001>
module attributes {stable_mosaic.version = 11 : i64} {
  func.func @tag_decoder_kernel(%arg0: i32, %arg1: i32, %arg2: memref<8x128xbf16, #tpu.memory_space<vmem>>, %arg3: memref<128x256xbf16, #tpu.memory_space<vmem>>, %arg4: memref<1x256xf32, #tpu.memory_space<vmem>>, %arg5: memref<256x256xbf16, #tpu.memory_space<vmem>>, %arg6: memref<1x256xf32, #tpu.memory_space<vmem>>, %arg7: memref<8x256xf32, #tpu.memory_space<vmem>>) attributes {dimension_semantics = [#tpu.dimension_semantics<parallel>, #tpu.dimension_semantics<parallel>], iteration_bounds = array<i64: 1, 2>, scalar_prefetch = 0 : i64, scratch_operands = 0 : i64, tpu.core_type = #tpu.core_type<tc>, window_params = [{transform_indices = @transform_0, window_bounds = array<i64: 8, 128>}, {pipeline_mode = #tpu.pipeline_mode<synchronous>, transform_indices = @transform_1, window_bounds = array<i64: 128, 256>}, {pipeline_mode = #tpu.pipeline_mode<synchronous>, transform_indices = @transform_2, window_bounds = array<i64: 1, 256>}, {transform_indices = @transform_3, window_bounds = array<i64: 256, 256>}, {transform_indices = @transform_4, window_bounds = array<i64: 1, 256>}, {transform_indices = @transform_5, window_bounds = array<i64: 8, 256>}]} {
    %c0 = arith.constant 0 : index
    %c0_0 = arith.constant 0 : index
    %0 = vector.load %arg2[%c0, %c0_0] : memref<8x128xbf16, #tpu.memory_space<vmem>>, vector<8x128xbf16>
    %c0_1 = arith.constant 0 : index
    %c0_2 = arith.constant 0 : index
    %1 = vector.load %arg3[%c0_1, %c0_2] : memref<128x256xbf16, #tpu.memory_space<vmem>>, vector<128x256xbf16>
    %cst = arith.constant dense<0.000000e+00> : vector<8x256xf32>
    %2 = tpu.matmul %0, %1, %cst {dimension_numbers = #tpu.dot_dimension_numbers<[1], [0], [0], [1], [0, 0, 1, 1], [], []>} : vector<8x128xbf16>, vector<128x256xbf16>, vector<8x256xf32> -> vector<8x256xf32>
    %c0_3 = arith.constant 0 : index
    %c0_4 = arith.constant 0 : index
    %3 = vector.load %arg4[%c0_3, %c0_4] : memref<1x256xf32, #tpu.memory_space<vmem>>, vector<1x256xf32>
    %4 = vector.broadcast %3 : vector<1x256xf32> to vector<8x256xf32>
    %5 = arith.addf %2, %4 : vector<8x256xf32>
    %cst_5 = arith.constant 0.000000e+00 : f32
    %6 = vector.broadcast %cst_5 : f32 to vector<8x256xf32>
    %7 = arith.maximumf %5, %6 : vector<8x256xf32>
    %8 = arith.truncf %7 : vector<8x256xf32> to vector<8x256xbf16>
    %c0_6 = arith.constant 0 : index
    %c0_7 = arith.constant 0 : index
    %9 = vector.load %arg5[%c0_6, %c0_7] : memref<256x256xbf16, #tpu.memory_space<vmem>>, vector<256x256xbf16>
    %cst_8 = arith.constant dense<0.000000e+00> : vector<8x256xf32>
    %10 = tpu.matmul %8, %9, %cst_8 {dimension_numbers = #tpu.dot_dimension_numbers<[1], [0], [0], [1], [0, 0, 1, 1], [], []>} : vector<8x256xbf16>, vector<256x256xbf16>, vector<8x256xf32> -> vector<8x256xf32>
    %c0_9 = arith.constant 0 : index
    %c0_10 = arith.constant 0 : index
    %11 = vector.load %arg6[%c0_9, %c0_10] : memref<1x256xf32, #tpu.memory_space<vmem>>, vector<1x256xf32>
    %12 = vector.broadcast %11 : vector<1x256xf32> to vector<8x256xf32>
    %13 = arith.addf %10, %12 : vector<8x256xf32>
    %14 = arith.negf %13 : vector<8x256xf32>
    %15 = math.exp %14 : vector<8x256xf32>
    %cst_11 = arith.constant 1.000000e+00 : f32
    %16 = vector.broadcast %cst_11 : f32 to vector<8x256xf32>
    %17 = arith.addf %16, %15 : vector<8x256xf32>
    %18 = arith.divf %16, %17 : vector<8x256xf32>
    %c0_12 = arith.constant 0 : index
    %c0_13 = arith.constant 0 : index
    %19 = vector.load %arg7[%c0_12, %c0_13] : memref<8x256xf32, #tpu.memory_space<vmem>>, vector<8x256xf32>
    tpu.vector_store %arg7[%c0_12, %c0_13], %18 {strides = array<i32>} : memref<8x256xf32, #tpu.memory_space<vmem>>, vector<8x256xf32>,
    return
  }
  func.func @transform_0(%arg0: i32, %arg1: i32) -> (i32, i32) {
    %c0_i32 = arith.constant 0 : i32
    %c0_i32_0 = arith.constant 0 : i32
    return %arg0, %c0_i32 : i32, i32
  }
  func.func @transform_1(%arg0: i32, %arg1: i32) -> (i32, i32) {
    %c0_i32 = arith.constant 0 : i32
    %c0_i32_0 = arith.constant 0 : i32
    %c0_i32_1 = arith.constant 0 : i32
    return %c0_i32, %c0_i32_0 : i32, i32
  }
  func.func @transform_2(%arg0: i32, %arg1: i32) -> (i32, i32) {
    %c0_i32 = arith.constant 0 : i32
    %c0_i32_0 = arith.constant 0 : i32
    %c0_i32_1 = arith.constant 0 : i32
    return %c0_i32, %c0_i32_0 : i32, i32
  }
  func.func @transform_3(%arg0: i32, %arg1: i32) -> (i32, i32) {
    %c0_i32 = arith.constant 0 : i32
    %c0_i32_0 = arith.constant 0 : i32
    return %c0_i32, %arg1 : i32, i32
  }
  func.func @transform_4(%arg0: i32, %arg1: i32) -> (i32, i32) {
    %c0_i32 = arith.constant 0 : i32
    %c0_i32_0 = arith.constant 0 : i32
    return %c0_i32, %arg1 : i32, i32
  }
  func.func @transform_5(%arg0: i32, %arg1: i32) -> (i32, i32) {
    %c0_i32 = arith.constant 0 : i32
    return %arg0, %arg1 : i32, i32
  }
}

</mosaic_0001>

<llo_original>
// kernel: _forward_impl.1
$region0: #{_forward_impl.1}
  #allocation0 [shape = 'u32[]', space=smem, size = 0x4, offset = 0x4, fixed_abs, tag = 'smem constant byte address 0x4 - core index']
  #allocation1 [shape = 'u32[144,128]{1,0:T(1,128)}', space=vmem, size = 0x12000, scoped, tag = 'internal scratch']
  %s0 = inlined_call_operand.vmem [shape: bf16[8,128], index: 0, kind: input, shape index: {}]
  %s1 = inlined_call_operand.hbm [shape: bf16[128,256], index: 1, kind: input, shape index: {}]
  %s2 = inlined_call_operand.vmem [shape: f32[1,256], index: 2, kind: input, shape index: {}]
  %s3 = inlined_call_operand.hbm [shape: bf16[256,512], index: 3, kind: input, shape index: {}]
  %s4 = inlined_call_operand.vmem [shape: f32[1,512], index: 4, kind: input, shape index: {}]
  %s5 = inlined_call_operand.vmem [shape: f32[8,512], index: 5, kind: output, shape index: {}]
  %s6 = sld [smem:[#allocation0]]
  $region61: #{_forward_impl.1} parent=0
    _
  %s8 = ssub.s32 1, %s6
  %s9 = scalar_select 0, %s8, %s6
  $region1: #{_forward_impl.1} parent=0
    #allocation2 [shape = 'u8[65536]{0}', space=vmem, size = 0x10000, scoped, tag = 'input window, operand 1, single buffered']
    #allocation3 [shape = 's32[2]{0}', space=sflag, size = 0x8, scoped, tag = 'scoped memory for _forward_impl.1']
    #allocation4 [shape = 'u8[262144]{0}', space=vmem, size = 0x40000, scoped, tag = 'input window, operand 3']
    #allocation5 [shape = 's32[2]{0}', space=sflag, size = 0x8, scoped, tag = 'scoped memory for _forward_impl.1']
    %10 = vsyncpa [#allocation3], 0
    %11 = vsyncpa [#allocation5], 0
    %s12 = scalar_lea.sflag [#allocation5], 1
    %13 = vsyncpa %s12, 0
    loop: start=0, step=1, limit=4
    $region2: #{_forward_impl.1} parent=1 // loop_pre_header
      _
    $region3: #{_forward_impl.1} parent=1 // loop_header
      %s15 = sphi 0, %s19
      %p16 = scmp.ge.s32.totalorder %s15, 4
      %s22 = sphi 0, %s34
      %s23 = sphi 0, %s30
      %s24 = sphi 0, %s22
      %s25 = sphi 0, %s23
      %s26 = sphi 0, %s24
      %s27 = sphi 0, %s25
      %s37 = sphi 0, %s39
      %s40 = sphi 0, %s37
      %s41 = sphi 0, %s40
      %s57 = sphi 0, %s41
      %s61 = sphi 0, %s61
      %s63 = sphi 0, %s61
      %s64 = sphi 0, %s63
      %s78 = sphi 0, %s64
      %s82 = sphi 0, %s82
      %s84 = sphi 0, %s82
      %s85 = sphi 0, %s84
      %s99 = sphi 0, %s85
      %s105 = sphi 0, %s107
      %s108 = sphi 0, %s105
      %s109 = sphi 0, %s108
      %s125 = sphi 0, %s109
      %s131 = sphi 0, %s133
      %s134 = sphi 0, %s131
      %s135 = sphi 0, %s134
      %s151 = sphi 0, %s135
      %s159 = sphi 0, %s161
      %s162 = sphi 0, %s159
      %s163 = sphi 0, %s162
      %s179 = sphi 0, %s163
    $region4: #{_forward_impl.1} parent=1 // loop_header_branch
      %18 = sbr.rel (%p16) target = $region8
    $region5: #{_forward_impl.1} parent=1 // loop_body
      %s20 = ssub.s32 %s15, 1
      %s21 = ssub.s32 %s15, 2
      %s28 = sadd.s32 1, %s23
      %p29 = scmp.ge.s32.totalorder %s28, 2
      %s30 = scalar_select %p29, 0, %s28
      %s31 = sadd.s32 1, %s22
      %s32 = scalar_select %p29, %s31, %s22
      %p33 = scmp.ge.s32.totalorder %s32, 1
      %s34 = scalar_select %p33, 0, %s32
      %s35 = ssub.s32 %s22, %s34
      %p36 = scmp.eq.s32.totalorder %s35, 0
      %s38 = sadd.s32 %s37, 1
      %s39 = scalar_select %p36, %s37, %s38
      %p42 = pneg %p36
      %p43 = scmp.eq.s32.totalorder %s15, 1
      %p44 = por %p42, %p43
      %p45 = scmp.ne.s32.totalorder %s37, %s40
      %p46 = scmp.eq.s32.totalorder %s15, 0
      %p47 = por %p45, %p46
      %p48 = scmp.ne.s32.totalorder %s37, %s40
      %p49 = scmp.eq.s32.totalorder %s20, 1
      %p50 = por %p48, %p49
      %p51 = scmp.ne.s32.totalorder %s40, %s41
      %p52 = scmp.eq.s32.totalorder %s20, 0
      %p53 = por %p51, %p52
      %p54 = scmp.ne.s32.totalorder %s40, %s41
      %p55 = scmp.eq.s32.totalorder %s21, 1
      %p56 = por %p54, %p55
      %p58 = scmp.ne.s32.totalorder %s41, %s57
      %p59 = scmp.eq.s32.totalorder %s21, 0
      %p60 = por %p58, %p59
      %s62 = sadd.s32 %s61, 1
      %p65 = scmp.eq.s32.totalorder %s15, 1
      %p66 = scmp.ne.s32.totalorder %s61, %s63
      %p67 = scmp.eq.s32.totalorder %s15, 0
      %p68 = por %p66, %p67
      %p69 = scmp.ne.s32.totalorder %s61, %s63
      %p70 = scmp.eq.s32.totalorder %s20, 1
      %p71 = por %p69, %p70
      %p72 = scmp.ne.s32.totalorder %s63, %s64
      %p73 = scmp.eq.s32.totalorder %s20, 0
      %p74 = por %p72, %p73
      %p75 = scmp.ne.s32.totalorder %s63, %s64
      %p76 = scmp.eq.s32.totalorder %s21, 1
      %p77 = por %p75, %p76
      %p79 = scmp.ne.s32.totalorder %s64, %s78
      %p80 = scmp.eq.s32.totalorder %s21, 0
      %p81 = por %p79, %p80
      %s83 = sadd.s32 %s82, 1
      %p86 = scmp.eq.s32.totalorder %s15, 1
      %p87 = scmp.ne.s32.totalorder %s82, %s84
      %p88 = scmp.eq.s32.totalorder %s15, 0
      %p89 = por %p87, %p88
      %p90 = scmp.ne.s32.totalorder %s82, %s84
      %p91 = scmp.eq.s32.totalorder %s20, 1
      %p92 = por %p90, %p91
      %p93 = scmp.ne.s32.totalorder %s84, %s85
      %p94 = scmp.eq.s32.totalorder %s20, 0
      %p95 = por %p93, %p94
      %p96 = scmp.ne.s32.totalorder %s84, %s85
      %p97 = scmp.eq.s32.totalorder %s21, 1
      %p98 = por %p96, %p97
      %p100 = scmp.ne.s32.totalorder %s85, %s99
      %p101 = scmp.eq.s32.totalorder %s21, 0
      %p102 = por %p100, %p101
      %s103 = ssub.s32 %s23, %s30
      %p104 = scmp.eq.s32.totalorder %s103, 0
      %s106 = sadd.s32 %s105, 1
      %s107 = scalar_select %p104, %s105, %s106
      %p110 = pneg %p104
      %p111 = scmp.eq.s32.totalorder %s15, 1
      %p112 = por %p110, %p111
      %p113 = scmp.ne.s32.totalorder %s105, %s108
      %p114 = scmp.eq.s32.totalorder %s15, 0
      %p115 = por %p113, %p114
      %p116 = scmp.ne.s32.totalorder %s105, %s108
      %p117 = scmp.eq.s32.totalorder %s20, 1
      %p118 = por %p116, %p117
      %p119 = scmp.ne.s32.totalorder %s108, %s109
      %p120 = scmp.eq.s32.totalorder %s20, 0
      %p121 = por %p119, %p120
      %p122 = scmp.ne.s32.totalorder %s108, %s109
      %p123 = scmp.eq.s32.totalorder %s21, 1
      %p124 = por %p122, %p123
      %p126 = scmp.ne.s32.totalorder %s109, %s125
      %p127 = scmp.eq.s32.totalorder %s21, 0
      %p128 = por %p126, %p127
      %s129 = ssub.s32 %s23, %s30
      %p130 = scmp.eq.s32.totalorder %s129, 0
      %s132 = sadd.s32 %s131, 1
      %s133 = scalar_select %p130, %s131, %s132
      %p136 = pneg %p130
      %p137 = scmp.eq.s32.totalorder %s15, 1
      %p138 = por %p136, %p137
      %p139 = scmp.ne.s32.totalorder %s131, %s134
      %p140 = scmp.eq.s32.totalorder %s15, 0
      %p141 = por %p139, %p140
      %p142 = scmp.ne.s32.totalorder %s131, %s134
      %p143 = scmp.eq.s32.totalorder %s20, 1
      %p144 = por %p142, %p143
      %p145 = scmp.ne.s32.totalorder %s134, %s135
      %p146 = scmp.eq.s32.totalorder %s20, 0
      %p147 = por %p145, %p146
      %p148 = scmp.ne.s32.totalorder %s134, %s135
      %p149 = scmp.eq.s32.totalorder %s21, 1
      %p150 = por %p148, %p149
      %p152 = scmp.ne.s32.totalorder %s135, %s151
      %p153 = scmp.eq.s32.totalorder %s21, 0
      %p154 = por %p152, %p153
      %s155 = ssub.s32 %s22, %s34
      %s156 = ssub.s32 %s23, %s30
      %s157 = sor.u32 %s155, %s156
      %p158 = scmp.eq.s32.totalorder %s157, 0
      %s160 = sadd.s32 %s159, 1
      %s161 = scalar_select %p158, %s159, %s160
      %p164 = pneg %p158
      %p165 = scmp.eq.s32.totalorder %s15, 1
      %p166 = por %p164, %p165
      %p167 = scmp.ne.s32.totalorder %s159, %s162
      %p168 = scmp.eq.s32.totalorder %s15, 0
      %p169 = por %p167, %p168
      %p170 = scmp.ne.s32.totalorder %s159, %s162
      %p171 = scmp.eq.s32.totalorder %s20, 1
      %p172 = por %p170, %p171
      %p173 = scmp.ne.s32.totalorder %s162, %s163
      %p174 = scmp.eq.s32.totalorder %s20, 0
      %p175 = por %p173, %p174
      %p176 = scmp.ne.s32.totalorder %s162, %s163
      %p177 = scmp.eq.s32.totalorder %s21, 1
      %p178 = por %p176, %p177
      %p180 = scmp.ne.s32.totalorder %s163, %s179
      %p181 = scmp.eq.s32.totalorder %s21, 0
      %p182 = por %p180, %p181
      %p183 = scmp.le.s32.totalorder 1, %s15
      %p184 = scmp.lt.s32.totalorder %s15, 3
      %p185 = pnand %p183, %p184
      %p186 = pneg %p185
      // Predicated region
      $region9: #{_forward_impl.1} parent=5 // pred_check
        _
      $region10: #{_forward_impl.1} parent=5 // pred_check_branch
        %188 = sbr.rel (%p185) target = $region12
      $region11: #{_forward_impl.1} parent=5 // pred_region
        %s189 = ssub.s32 %s15, 1
        // Predicated region
        $region13: #{_forward_impl.1} parent=11 // pred_check
          %p190 = pneg %p53
        $region14: #{_forward_impl.1} parent=11 // pred_check_branch
          %192 = sbr.rel (%p190) target = $region16
        $region15: #{_forward_impl.1} parent=11 // pred_region
          %p193 = scmp.lt.s32.totalorder %s24, 0
          %s194 = scalar_select %p193, %s24, 0
          %s195 = smul.addr %s194, 4
          %s196 = scalar_lea.vmem %s0, %s195
        $region16: #{_forward_impl.1} parent=11 // pred_fallthru
          _
        // Predicated region
        $region17: #{_forward_impl.1} parent=11 // pred_check
          %p197 = pneg %p74
        $region18: #{_forward_impl.1} parent=11 // pred_check_branch
          %199 = sbr.rel (%p197) target = $region20
        $region19: #{_forward_impl.1} parent=11 // pred_region
          %s201 = ssub.s32 2048, 2048
          %202 = vsyncadd [#allocation3], %s201
          %s203 = sshll.u32 [#allocation2], 4
          %s204 = int_to_ptr.vmem [resolvable:$true] %s203
          %209 = dma.hbm_to_vmem [thread:$0]  %s1, 2048, %s204, [#allocation3], 128, 128, 8
        $region20: #{_forward_impl.1} parent=11 // pred_fallthru
          _
        // Predicated region
        $region21: #{_forward_impl.1} parent=11 // pred_check
          %p210 = pneg %p95
        $region22: #{_forward_impl.1} parent=11 // pred_check_branch
          %212 = sbr.rel (%p210) target = $region24
        $region23: #{_forward_impl.1} parent=11 // pred_region
          _
        $region24: #{_forward_impl.1} parent=11 // pred_fallthru
          _
      $region12: #{_forward_impl.1} parent=5 // pred_fallthru
        _
      %p213 = scmp.lt.s32.totalorder %s15, 2
      // Predicated region
      $region25: #{_forward_impl.1} parent=5 // pred_check
        %p214 = pneg %p213
      $region26: #{_forward_impl.1} parent=5 // pred_check_branch
        %216 = sbr.rel (%p214) target = $region28
      $region27: #{_forward_impl.1} parent=5 // pred_region
        // Predicated region
        $region29: #{_forward_impl.1} parent=27 // pred_check
          %p217 = pneg %p115
        $region30: #{_forward_impl.1} parent=27 // pred_check_branch
          %219 = sbr.rel (%p217) target = $region32
        $region31: #{_forward_impl.1} parent=27 // pred_region
          %s220 = sand.u32 %s105, 1
          %s221 = scalar_lea.sflag [#allocation5], %s220
          %s222 = sand.u32 %s105, 1
          %s223 = smul.addr %s222, 256
          %s224 = scalar_lea.vmem [#allocation4], %s223
          %s225 = smul.u32 2, %s23
          %s227 = ssub.s32 4096, 4096
          %228 = vsyncadd %s221, %s227
          %s229 = smul.addr %s225, 64
          %s230 = scalar_lea.hbm %s3, %s229
          %s231 = sshll.u32 %s224, 4
          %s232 = int_to_ptr.vmem [resolvable:$true] %s231
          %237 = dma.hbm_to_vmem [thread:$0]  %s230, 4096, %s232, %s221, 256, 128, 8
        $region32: #{_forward_impl.1} parent=27 // pred_fallthru
          _
        // Predicated region
        $region33: #{_forward_impl.1} parent=27 // pred_check
          %p238 = pneg %p141
        $region34: #{_forward_impl.1} parent=27 // pred_check_branch
          %240 = sbr.rel (%p238) target = $region36
        $region35: #{_forward_impl.1} parent=27 // pred_region
          %s241 = smul.u32 2, %s23
          %p242 = scmp.lt.s32.totalorder %s241, 3
          %s243 = scalar_select %p242, %s241, 3
          %s244 = scalar_lea.vmem %s4, %s243
          %s245 = smul.u32 2, %s23
        $region36: #{_forward_impl.1} parent=27 // pred_fallthru
          _
      $region28: #{_forward_impl.1} parent=5 // pred_fallthru
        _
      %p246 = scmp.le.s32.totalorder 1, %s15
      %p247 = scmp.lt.s32.totalorder %s15, 3
      %p248 = pnand %p246, %p247
      %p249 = pneg %p248
      // Predicated region
      $region37: #{_forward_impl.1} parent=5 // pred_check
        _
      $region38: #{_forward_impl.1} parent=5 // pred_check_branch
        %251 = sbr.rel (%p248) target = $region40
      $region39: #{_forward_impl.1} parent=5 // pred_region
        %s252 = ssub.s32 %s15, 1
        // Predicated region
        $region41: #{_forward_impl.1} parent=39 // pred_check
          %p253 = pneg %p74
        $region42: #{_forward_impl.1} parent=39 // pred_check_branch
          %255 = sbr.rel (%p253) target = $region44
        $region43: #{_forward_impl.1} parent=39 // pred_region
          %256 = dma.done [#allocation3], 2048
        $region44: #{_forward_impl.1} parent=39 // pred_fallthru
          _
        %s257 = sand.u32 %s108, 1
        %s258 = scalar_lea.sflag [#allocation5], %s257
        %s259 = sand.u32 %s108, 1
        %s260 = smul.addr %s259, 256
        %s261 = scalar_lea.vmem [#allocation4], %s260
        // Predicated region
        $region45: #{_forward_impl.1} parent=39 // pred_check
          %p262 = pneg %p121
        $region46: #{_forward_impl.1} parent=39 // pred_check_branch
          %264 = sbr.rel (%p262) target = $region48
        $region47: #{_forward_impl.1} parent=39 // pred_region
          %265 = dma.done %s258, 4096
        $region48: #{_forward_impl.1} parent=39 // pred_fallthru
          _
        %p266 = scmp.lt.s32.totalorder %s24, 0
        %s267 = scalar_select %p266, %s24, 0
        %s268 = smul.addr %s267, 4
        %s269 = scalar_lea.vmem %s0, %s268
        %p270 = pneg %p53
        %p271 = pneg %p50
        %p272 = pneg %p74
        %p273 = pneg %p71
        %p274 = pneg %p95
        %p275 = pneg %p92
        %s276 = sand.u32 %s108, 1
        %s277 = scalar_lea.sflag [#allocation5], %s276
        %s278 = sand.u32 %s108, 1
        %s279 = smul.addr %s278, 256
        %s280 = scalar_lea.vmem [#allocation4], %s279
        %p281 = pneg %p121
        %p282 = pneg %p118
        %s283 = smul.u32 2, %s25
        %p284 = scmp.lt.s32.totalorder %s283, 3
        %s285 = scalar_select %p284, %s283, 3
        %s286 = scalar_lea.vmem %s4, %s285
        %p287 = pneg %p147
        %p288 = pneg %p144
        %p289 = pneg %p175
        %p290 = pneg %p172
        %s291 = smul.u32 2, %s25
        %p292 = scmp.lt.s32.totalorder %s24, 0
        %s293 = scalar_select %p292, %s24, 0
        %p294 = scmp.lt.s32.totalorder %s291, 3
        %s295 = scalar_select %p294, %s291, 3
        %s296 = smul.addr %s293, 4
        %s297 = sadd.s32 %s295, %s296
        %s298 = smul.addr %s297, 8
        %s299 = scalar_lea.vmem %s5, %s298
        %p300 = scmp.lt.s32.totalorder %s24, 0
        %s301 = scalar_select %p300, %s24, 0
        %s302 = smul.addr %s301, 4
        %s303 = scalar_lea.vmem %s0, %s302
        %s304 = smul.u32 2, %s25
        %s305 = smul.u32 2, %s25
        %p306 = scmp.lt.s32.totalorder %s305, 3
        %s307 = scalar_select %p306, %s305, 3
        %s308 = scalar_lea.vmem %s4, %s307
        %s309 = smul.u32 2, %s25
        %s310 = smul.u32 2, %s25
        %p311 = scmp.lt.s32.totalorder %s24, 0
        %s312 = scalar_select %p311, %s24, 0
        %p313 = scmp.lt.s32.totalorder %s310, 3
        %s314 = scalar_select %p313, %s310, 3
        %s315 = smul.addr %s312, 4
        %s316 = sadd.s32 %s314, %s315
        %s317 = smul.addr %s316, 8
        %s318 = scalar_lea.vmem %s5, %s317
        %s319 = smul.u32 2, %s25
        %v321 = vld [vmem:[%s303] sm:$0xf]
        %v322 = vld [vmem:[#allocation2] sm:$0xff]
        %v323 = vld [vmem:[#allocation2 + $0x8] sm:$0xff]
        %v324 = vld [vmem:[#allocation2 + $0x10] sm:$0xff]
        %v325 = vld [vmem:[#allocation2 + $0x18] sm:$0xff]
        %v326 = vld [vmem:[#allocation2 + $0x20] sm:$0xff]
        %v327 = vld [vmem:[#allocation2 + $0x28] sm:$0xff]
        %v328 = vld [vmem:[#allocation2 + $0x30] sm:$0xff]
        %v329 = vld [vmem:[#allocation2 + $0x38] sm:$0xff]
        %v330 = vld [vmem:[#allocation2 + $0x40] sm:$0xff]
        %v331 = vld [vmem:[#allocation2 + $0x48] sm:$0xff]
        %v332 = vld [vmem:[#allocation2 + $0x50] sm:$0xff]
        %v333 = vld [vmem:[#allocation2 + $0x58] sm:$0xff]
        %v334 = vld [vmem:[#allocation2 + $0x60] sm:$0xff]
        %v335 = vld [vmem:[#allocation2 + $0x68] sm:$0xff]
        %v336 = vld [vmem:[#allocation2 + $0x70] sm:$0xff]
        %v337 = vld [vmem:[#allocation2 + $0x78] sm:$0xff]
        %v338 = vld [vmem:[%s2] sm:$0x3]
        %v340 = vlaneseq
        %v341 = vshrl.u32 %v340, 7
        %v342 = vsub.s32 0, %v341
        %v343 = vrot.slane %v338, %v342
        %v344 = vlaneseq
        %v345 = vshrl.u32 %v344, 7
        %v346 = vsub.s32 1, %v345
        %v347 = vrot.slane %v338, %v346
        %v366 = vunpack.c.l.b16 %v322
        %v367 = vunpack.c.h.b16 %v322
        %v368 = vunpack.c.l.b16 %v323
        %v369 = vunpack.c.h.b16 %v323
        %v370 = vunpack.c.l.b16 %v324
        %v371 = vunpack.c.h.b16 %v324
        %v372 = vunpack.c.l.b16 %v325
        %v373 = vunpack.c.h.b16 %v325
        %v374 = vunpack.c.l.b16 %v326
        %v375 = vunpack.c.h.b16 %v326
        %v376 = vunpack.c.l.b16 %v327
        %v377 = vunpack.c.h.b16 %v327
        %v378 = vunpack.c.l.b16 %v328
        %v379 = vunpack.c.h.b16 %v328
        %v380 = vunpack.c.l.b16 %v329
        %v381 = vunpack.c.h.b16 %v329
        %v382 = vunpack.c.l.b16 %v330
        %v383 = vunpack.c.h.b16 %v330
        %v384 = vunpack.c.l.b16 %v331
        %v385 = vunpack.c.h.b16 %v331
        %v386 = vunpack.c.l.b16 %v332
        %v387 = vunpack.c.h.b16 %v332
        %v388 = vunpack.c.l.b16 %v333
        %v389 = vunpack.c.h.b16 %v333
        %v390 = vunpack.c.l.b16 %v334
        %v391 = vunpack.c.h.b16 %v334
        %v392 = vunpack.c.l.b16 %v335
        %v393 = vunpack.c.h.b16 %v335
        %v394 = vunpack.c.l.b16 %v336
        %v395 = vunpack.c.h.b16 %v336
        %v396 = vunpack.c.l.b16 %v337
        %v397 = vunpack.c.h.b16 %v337
        %v398 = vpack.c.b16 %v368, %v366
        %v399 = vpack.c.b16 %v369, %v367
        %v400 = vpack.c.b16 %v372, %v370
        %v401 = vpack.c.b16 %v373, %v371
        %v402 = vpack.c.b16 %v376, %v374
        %v403 = vpack.c.b16 %v377, %v375
        %v404 = vpack.c.b16 %v380, %v378
        %v405 = vpack.c.b16 %v381, %v379
        %v406 = vpack.c.b16 %v384, %v382
        %v407 = vpack.c.b16 %v385, %v383
        %v408 = vpack.c.b16 %v388, %v386
        %v409 = vpack.c.b16 %v389, %v387
        %v410 = vpack.c.b16 %v392, %v390
        %v411 = vpack.c.b16 %v393, %v391
        %v412 = vpack.c.b16 %v396, %v394
        %v413 = vpack.c.b16 %v397, %v395
        %430 = vmatprep.subr.bf16.mxu0 %v413
        %431 = vmatpush1.bf16.msra.mxu0 %v412
        %432 = vmatprep.subr.bf16.mxu0 %v411
        %433 = vmatpush1.bf16.msra.mxu0 %v410
        %434 = vmatprep.subr.bf16.mxu0 %v409
        %435 = vmatpush1.bf16.msra.mxu0 %v408
        %436 = vmatprep.subr.bf16.mxu0 %v407
        %437 = vmatpush1.bf16.msra.mxu0 %v406
        %438 = vmatprep.subr.bf16.mxu0 %v405
        %439 = vmatpush1.bf16.msra.mxu0 %v404
        %440 = vmatprep.subr.bf16.mxu0 %v403
        %441 = vmatpush1.bf16.msra.mxu0 %v402
        %442 = vmatprep.subr.bf16.mxu0 %v401
        %443 = vmatpush1.bf16.msra.mxu0 %v400
        %444 = vmatprep.subr.bf16.mxu0 %v399
        %445 = vmatpush1.bf16.msra.mxu0 %v398
        %446 = vmatprep.subr.bf16.mxu0 0
        %447 = vmatpush2.bf16.msra.mxu0 0
        %448 = vmatprep.subr.bf16.mxu0 0
        %449 = vmatpush2.bf16.msra.mxu0 0
        %450 = vmatprep.subr.bf16.mxu0 0
        %451 = vmatpush2.bf16.msra.mxu0 0
        %452 = vmatprep.subr.bf16.mxu0 0
        %453 = vmatpush2.bf16.msra.mxu0 0
        %454 = vmatprep.subr.bf16.mxu0 0
        %455 = vmatpush2.bf16.msra.mxu0 0
        %456 = vmatprep.subr.bf16.mxu0 0
        %457 = vmatpush2.bf16.msra.mxu0 0
        %458 = vmatprep.subr.bf16.mxu0 0
        %459 = vmatpush2.bf16.msra.mxu0 0
        %460 = vmatprep.subr.bf16.mxu0 0
        %461 = vmatpush2.bf16.msra.mxu0 0
        %462 = vmatprep.mubr.bf16.mxu0 0
        %463 = vmatmul.mubr.bf16.gmra.mxu0 %v321
        %v464 = vpop.f32.mrf.mxu0
        %v465 = vadd.f32 %v343, %v464
        %v466 = vpop.f32.mrf.mxu0
        %v467 = vadd.f32 %v347, %v466
        %v468 = vpop.f32.mrf.mxu0
        %v469 = vpop.f32.mrf.mxu0
        %470 = vdwg.mxu0
        %v471 = vmax.f32 %v465, 0.0
        %v472 = vmax.f32 %v467, 0.0
        %v473 = vpack.c.bf16 %v471, %v471
        %v474 = vpack.c.bf16 %v472, %v472
        %v475 = vld [vmem:[%s261] sm:$0xff]
        %v476 = vld [vmem:[%s261 + $0x8] sm:$0xff]
        %v477 = vld [vmem:[%s261 + $0x10] sm:$0xff]
        %v478 = vld [vmem:[%s261 + $0x18] sm:$0xff]
        %v479 = vld [vmem:[%s261 + $0x20] sm:$0xff]
        %v480 = vld [vmem:[%s261 + $0x28] sm:$0xff]
        %v481 = vld [vmem:[%s261 + $0x30] sm:$0xff]
        %v482 = vld [vmem:[%s261 + $0x38] sm:$0xff]
        %v483 = vld [vmem:[%s261 + $0x40] sm:$0xff]
        %v484 = vld [vmem:[%s261 + $0x48] sm:$0xff]
        %v485 = vld [vmem:[%s261 + $0x50] sm:$0xff]
        %v486 = vld [vmem:[%s261 + $0x58] sm:$0xff]
        %v487 = vld [vmem:[%s261 + $0x60] sm:$0xff]
        %v488 = vld [vmem:[%s261 + $0x68] sm:$0xff]
        %v489 = vld [vmem:[%s261 + $0x70] sm:$0xff]
        %v490 = vld [vmem:[%s261 + $0x78] sm:$0xff]
        %v491 = vld [vmem:[%s261 + $0x80] sm:$0xff]
        %v492 = vld [vmem:[%s261 + $0x88] sm:$0xff]
        %v493 = vld [vmem:[%s261 + $0x90] sm:$0xff]
        %v494 = vld [vmem:[%s261 + $0x98] sm:$0xff]
        %v495 = vld [vmem:[%s261 + $0xa0] sm:$0xff]
        %v496 = vld [vmem:[%s261 + $0xa8] sm:$0xff]
        %v497 = vld [vmem:[%s261 + $0xb0] sm:$0xff]
        %v498 = vld [vmem:[%s261 + $0xb8] sm:$0xff]
        %v499 = vld [vmem:[%s261 + $0xc0] sm:$0xff]
        %v500 = vld [vmem:[%s261 + $0xc8] sm:$0xff]
        %v501 = vld [vmem:[%s261 + $0xd0] sm:$0xff]
        %v502 = vld [vmem:[%s261 + $0xd8] sm:$0xff]
        %v503 = vld [vmem:[%s261 + $0xe0] sm:$0xff]
        %v504 = vld [vmem:[%s261 + $0xe8] sm:$0xff]
        %v505 = vld [vmem:[%s261 + $0xf0] sm:$0xff]
        %v506 = vld [vmem:[%s261 + $0xf8] sm:$0xff]
        %v507 = vld [vmem:[%s308] sm:$0x3]
        %v509 = vlaneseq
        %v510 = vshrl.u32 %v509, 7
        %v511 = vsub.s32 0, %v510
        %v512 = vrot.slane %v507, %v511
        %v513 = vlaneseq
        %v514 = vshrl.u32 %v513, 7
        %v515 = vsub.s32 1, %v514
        %v516 = vrot.slane %v507, %v515
        %v551 = vunpack.c.l.b16 %v475
        %v552 = vunpack.c.h.b16 %v475
        %v553 = vunpack.c.l.b16 %v476
        %v554 = vunpack.c.h.b16 %v476
        %v555 = vunpack.c.l.b16 %v477
        %v556 = vunpack.c.h.b16 %v477
        %v557 = vunpack.c.l.b16 %v478
        %v558 = vunpack.c.h.b16 %v478
        %v559 = vunpack.c.l.b16 %v479
        %v560 = vunpack.c.h.b16 %v479
        %v561 = vunpack.c.l.b16 %v480
        %v562 = vunpack.c.h.b16 %v480
        %v563 = vunpack.c.l.b16 %v481
        %v564 = vunpack.c.h.b16 %v481
        %v565 = vunpack.c.l.b16 %v482
        %v566 = vunpack.c.h.b16 %v482
        %v567 = vunpack.c.l.b16 %v483
        %v568 = vunpack.c.h.b16 %v483
        %v569 = vunpack.c.l.b16 %v484
        %v570 = vunpack.c.h.b16 %v484
        %v571 = vunpack.c.l.b16 %v485
        %v572 = vunpack.c.h.b16 %v485
        %v573 = vunpack.c.l.b16 %v486
        %v574 = vunpack.c.h.b16 %v486
        %v575 = vunpack.c.l.b16 %v487
        %v576 = vunpack.c.h.b16 %v487
        %v577 = vunpack.c.l.b16 %v488
        %v578 = vunpack.c.h.b16 %v488
        %v579 = vunpack.c.l.b16 %v489
        %v580 = vunpack.c.h.b16 %v489
        %v581 = vunpack.c.l.b16 %v490
        %v582 = vunpack.c.h.b16 %v490
        %v583 = vunpack.c.l.b16 %v491
        %v584 = vunpack.c.h.b16 %v491
        %v585 = vunpack.c.l.b16 %v492
        %v586 = vunpack.c.h.b16 %v492
        %v587 = vunpack.c.l.b16 %v493
        %v588 = vunpack.c.h.b16 %v493
        %v589 = vunpack.c.l.b16 %v494
        %v590 = vunpack.c.h.b16 %v494
        %v591 = vunpack.c.l.b16 %v495
        %v592 = vunpack.c.h.b16 %v495
        %v593 = vunpack.c.l.b16 %v496
        %v594 = vunpack.c.h.b16 %v496
        %v595 = vunpack.c.l.b16 %v497
        %v596 = vunpack.c.h.b16 %v497
        %v597 = vunpack.c.l.b16 %v498
        %v598 = vunpack.c.h.b16 %v498
        %v599 = vunpack.c.l.b16 %v499
        %v600 = vunpack.c.h.b16 %v499
        %v601 = vunpack.c.l.b16 %v500
        %v602 = vunpack.c.h.b16 %v500
        %v603 = vunpack.c.l.b16 %v501
        %v604 = vunpack.c.h.b16 %v501
        %v605 = vunpack.c.l.b16 %v502
        %v606 = vunpack.c.h.b16 %v502
        %v607 = vunpack.c.l.b16 %v503
        %v608 = vunpack.c.h.b16 %v503
        %v609 = vunpack.c.l.b16 %v504
        %v610 = vunpack.c.h.b16 %v504
        %v611 = vunpack.c.l.b16 %v505
        %v612 = vunpack.c.h.b16 %v505
        %v613 = vunpack.c.l.b16 %v506
        %v614 = vunpack.c.h.b16 %v506
        %v615 = vpack.c.b16 %v553, %v551
        %v616 = vpack.c.b16 %v554, %v552
        %v617 = vpack.c.b16 %v557, %v555
        %v618 = vpack.c.b16 %v558, %v556
        %v619 = vpack.c.b16 %v561, %v559
        %v620 = vpack.c.b16 %v562, %v560
        %v621 = vpack.c.b16 %v565, %v563
        %v622 = vpack.c.b16 %v566, %v564
        %v623 = vpack.c.b16 %v569, %v567
        %v624 = vpack.c.b16 %v570, %v568
        %v625 = vpack.c.b16 %v573, %v571
        %v626 = vpack.c.b16 %v574, %v572
        %v627 = vpack.c.b16 %v577, %v575
        %v628 = vpack.c.b16 %v578, %v576
        %v629 = vpack.c.b16 %v581, %v579
        %v630 = vpack.c.b16 %v582, %v580
        %v631 = vpack.c.b16 %v585, %v583
        %v632 = vpack.c.b16 %v586, %v584
        %v633 = vpack.c.b16 %v589, %v587
        %v634 = vpack.c.b16 %v590, %v588
        %v635 = vpack.c.b16 %v593, %v591
        %v636 = vpack.c.b16 %v594, %v592
        %v637 = vpack.c.b16 %v597, %v595
        %v638 = vpack.c.b16 %v598, %v596
        %v639 = vpack.c.b16 %v601, %v599
        %v640 = vpack.c.b16 %v602, %v600
        %v641 = vpack.c.b16 %v605, %v603
        %v642 = vpack.c.b16 %v606, %v604
        %v643 = vpack.c.b16 %v609, %v607
        %v644 = vpack.c.b16 %v610, %v608
        %v645 = vpack.c.b16 %v613, %v611
        %v646 = vpack.c.b16 %v614, %v612
        %679 = vmatprep.subr.bf16.mxu0 %v630
        %680 = vmatpush1.bf16.msra.mxu0 %v629
        %681 = vmatprep.subr.bf16.mxu0 %v628
        %682 = vmatpush1.bf16.msra.mxu0 %v627
        %683 = vmatprep.subr.bf16.mxu0 %v626
        %684 = vmatpush1.bf16.msra.mxu0 %v625
        %685 = vmatprep.subr.bf16.mxu0 %v624
        %686 = vmatpush1.bf16.msra.mxu0 %v623
        %687 = vmatprep.subr.bf16.mxu0 %v622
        %688 = vmatpush1.bf16.msra.mxu0 %v621
        %689 = vmatprep.subr.bf16.mxu0 %v620
        %690 = vmatpush1.bf16.msra.mxu0 %v619
        %691 = vmatprep.subr.bf16.mxu0 %v618
        %692 = vmatpush1.bf16.msra.mxu0 %v617
        %693 = vmatprep.subr.bf16.mxu0 %v616
        %694 = vmatpush1.bf16.msra.mxu0 %v615
        %695 = vmatprep.subr.bf16.mxu0 %v646
        %696 = vmatpush2.bf16.msra.mxu0 %v645
        %697 = vmatprep.subr.bf16.mxu0 %v644
        %698 = vmatpush2.bf16.msra.mxu0 %v643
        %699 = vmatprep.subr.bf16.mxu0 %v642
        %700 = vmatpush2.bf16.msra.mxu0 %v641
        %701 = vmatprep.subr.bf16.mxu0 %v640
        %702 = vmatpush2.bf16.msra.mxu0 %v639
        %703 = vmatprep.subr.bf16.mxu0 %v638
        %704 = vmatpush2.bf16.msra.mxu0 %v637
        %705 = vmatprep.subr.bf16.mxu0 %v636
        %706 = vmatpush2.bf16.msra.mxu0 %v635
        %707 = vmatprep.subr.bf16.mxu0 %v634
        %708 = vmatpush2.bf16.msra.mxu0 %v633
        %709 = vmatprep.subr.bf16.mxu0 %v632
        %710 = vmatpush2.bf16.msra.mxu0 %v631
        %711 = vmatprep.mubr.bf16.mxu0 %v474
        %712 = vmatmul.mubr.bf16.gmra.mxu0 %v473
        %v713 = vpop.f32.mrf.mxu0
        %v714 = vadd.f32 %v512, %v713
        %v715 = vpop.f32.mrf.mxu0
        %v716 = vadd.f32 %v516, %v715
        %v717 = vpop.f32.mrf.mxu0
        %v718 = vpop.f32.mrf.mxu0
        %719 = vdwg.mxu0
        %v720 = vxor.u32 %v714, 2147483648
        %v721 = vxor.u32 %v716, 2147483648
        %v722 = vmul.f32 %v720, 1.442695
        %v723 = vpow.pop %v722
        %v724 = vmul.f32 %v721, 1.442695
        %v725 = vpow.pop %v724
        %v726 = vadd.f32 %v723, 1.0
        %v727 = vadd.f32 %v725, 1.0
        %v728 = vrcp.pop %v726
        %v729 = vmul.f32 1.0, %v728
        %v730 = vrcp.pop %v727
        %v731 = vmul.f32 1.0, %v730
        %732 = vst [vmem:[%s318] sm:$0xff] %v729
        %733 = vst [vmem:[%s318 + $0x8] sm:$0xff] %v731
        %s734 = smul.u32 2, %s25
        %p735 = scmp.lt.s32.totalorder %s24, 0
        %s736 = scalar_select %p735, %s24, 0
        %p737 = scmp.lt.s32.totalorder %s734, 3
        %s738 = scalar_select %p737, %s734, 3
        %s739 = smul.addr %s736, 4
        %s740 = sadd.s32 %s738, %s739
        %s741 = smul.addr %s740, 8
        %s742 = scalar_lea.vmem %s5, %s741
        // Predicated region
        $region49: #{_forward_impl.1} parent=39 // pred_check
          %p743 = pneg %p172
        $region50: #{_forward_impl.1} parent=39 // pred_check_branch
          %745 = sbr.rel (%p743) target = $region52
        $region51: #{_forward_impl.1} parent=39 // pred_region
          %s746 = smul.u32 2, %s25
        $region52: #{_forward_impl.1} parent=39 // pred_fallthru
          _
      $region40: #{_forward_impl.1} parent=5 // pred_fallthru
        _
      %p747 = scmp.le.s32.totalorder 2, %s15
      // Predicated region
      $region53: #{_forward_impl.1} parent=5 // pred_check
        %p748 = pneg %p747
      $region54: #{_forward_impl.1} parent=5 // pred_check_branch
        %750 = sbr.rel (%p748) target = $region56
      $region55: #{_forward_impl.1} parent=5 // pred_region
        %s751 = ssub.s32 %s15, 2
        // Predicated region
        $region57: #{_forward_impl.1} parent=55 // pred_check
          %p752 = pneg %p178
        $region58: #{_forward_impl.1} parent=55 // pred_check_branch
          %754 = sbr.rel (%p752) target = $region60
        $region59: #{_forward_impl.1} parent=55 // pred_region
          %s755 = smul.u32 2, %s27
          %p756 = scmp.lt.s32.totalorder %s26, 0
          %s757 = scalar_select %p756, %s26, 0
          %p758 = scmp.lt.s32.totalorder %s755, 3
          %s759 = scalar_select %p758, %s755, 3
          %s760 = smul.addr %s757, 4
          %s761 = sadd.s32 %s759, %s760
          %s762 = smul.addr %s761, 8
          %s763 = scalar_lea.vmem %s5, %s762
        $region60: #{_forward_impl.1} parent=55 // pred_fallthru
          _
      $region56: #{_forward_impl.1} parent=5 // pred_fallthru
        _
    $region6: #{_forward_impl.1} parent=1 // loop_footer
      %s19 = sadd.s32 1, %s15
    $region7: #{_forward_impl.1} parent=1 // loop_footer_branch
      %14 = sbr.rel target = $region3
    $region8: #{_forward_impl.1} parent=1 // loop_exit
      _
    %764 = vsyncpa [#allocation3], 1
    %s765 = scalar_lea.sflag [#allocation3], 1
    %766 = vsyncpa %s765, 1
    %767 = vsyncpa [#allocation5], 1
    %s768 = scalar_lea.sflag [#allocation5], 1
    %769 = vsyncpa %s768, 1

</llo_original>
